<compile_context>
chip_gen: v5e
topology: v5e:2x2
jax: 0.10.0
libtpu: 0.0.40
codegen_flags: <defaults>
</compile_context>

<pallas_src>
import math

import jax
import jax.numpy as jnp
from jax.experimental import pallas as pl
from jax.experimental.pallas import tpu as pltpu


# ---------------------------------------------------------------------------
# Kernel
# ---------------------------------------------------------------------------
def _consensus_avg_kernel(x_ref, o_ref):
    """x_ref: (BBLK, T, CBLK) block in VMEM; o_ref: (BBLK, CBLK) mean over axis 1."""
    t_dim = x_ref.shape[1]
    inv_t = jnp.float32(1.0 / t_dim)
    if x_ref.dtype == jnp.float32:
        # Native f32 reduce over the segment (sublane) axis -- no upcast copy.
        acc = jnp.sum(x_ref[...], axis=1)
    elif t_dim <= 64:
        # fp32 accumulation of (BBLK, CBLK) slices: avoids materializing a
        # full-block fp32 upcast of the (bf16 / fp8) input tile.
        acc = x_ref[:, 0, :].astype(jnp.float32)
        for t in range(1, t_dim):
            acc = acc + x_ref[:, t, :].astype(jnp.float32)
    else:
        acc = jnp.sum(x_ref[...], axis=1, dtype=jnp.float32)
    o_ref[...] = (acc * inv_t).astype(o_ref.dtype)


# ---------------------------------------------------------------------------
# Block planning (padded-footprint aware, generation aware)
# ---------------------------------------------------------------------------
_SUBLANE = {4: 8, 2: 16, 1: 32}  # itemsize -> sublane packing multiple

_GEN_CFG = {
    # gen:   (target_block, vmem_budget, vmem_limit, split_2_steps, scoped_default, phys_cap)
    "v5e":     (3 << 20, 12 << 20, None,     False, 16 << 20, 100 << 20),
    "v6e":     (6 << 20, 24 << 20, None,     False, 32 << 20, 100 << 20),
    "v7x":     (12 << 20, 40 << 20, 48 << 20, True,  32 << 20, 56 << 20),
    "unknown": (4 << 20, 12 << 20, None,     False, 16 << 20, 56 << 20),
}


def _round_up(x, m):
    return ((x + m - 1) // m) * m


def _tpu_generation():
    try:
        kind = jax.devices()[0].device_kind.lower()
    except Exception:  # pragma: no cover - defensive
        return "unknown"
    if "v7" in kind:
        return "v7x"
    if "v6" in kind:
        return "v6e"
    if "v5e" in kind or "v5 lite" in kind or ("v5" in kind and "lite" in kind):
        return "v5e"
    return "unknown"


def _plan_blocks(B, T, C, dtype):
    """Pick (bblk, cblk, vmem_limit_bytes) from padded VMEM footprints."""
    gen = _tpu_generation()
    target, budget, vmem_limit, split2, scoped_default, phys_cap = _GEN_CFG[gen]
    isz = jnp.dtype(dtype).itemsize
    sub = _SUBLANE.get(isz, 8)
    t_pad = _round_up(T, sub)

    def lanes(cb):
        return _round_up(cb, 128)

    def footprint(bb, cb):
        b_pad = _round_up(bb, 8)
        return (2 * bb * t_pad * lanes(cb) * isz      # double-buffered input tile
                + b_pad * lanes(cb) * 4               # fp32 accumulator
                + 2 * b_pad * lanes(cb) * isz)        # double-buffered output tile

    # --- choose cblk so even the minimum batch block fits the budget ---------
    min_b = min(8, B)
    cblk = C
    if C > 128 and footprint(min_b, C) > budget:
        per_lane = 2 * min_b * t_pad * isz + _round_up(min_b, 8) * (4 + 2 * isz)
        cblk = max(128, min(C, (budget // max(1, per_lane)) // 128 * 128))

    # --- choose bblk: biggest block under the (padded) target and the budget -
    row_bytes = t_pad * lanes(cblk) * isz
    rows = max(1, target // max(1, row_bytes))
    while rows > 1 and footprint(min(rows, B), cblk) > budget:
        rows //= 2
    if rows >= B:
        bblk = B
    else:
        # Blocks not covering the full batch must be multiples of 8 so the
        # (bblk, cblk) output block satisfies the (8, 128) tiling rule.
        bblk = min(B, max(8, (rows // 8) * 8))

    # --- v7x: keep both TensorCores busy on inputs worth splitting -----------
    if (split2 and B * T * C * isz >= (1 << 20)
            and pl.cdiv(B, bblk) * pl.cdiv(C, cblk) < 2):
        if B > 8:
            bblk = min(bblk, _round_up(pl.cdiv(B, 2), 8))
        elif C >= 256:
            half_c = _round_up(pl.cdiv(C, 2), 128)
            if half_c < C:
                cblk = half_c

    # --- raise the scoped-VMEM limit only if the planned footprint needs it --
    fp = footprint(min(bblk, B), cblk)
    if fp + (2 << 20) > scoped_default:
        vmem_limit = min(phys_cap, max(vmem_limit or 0, fp + (4 << 20)))
    return bblk, cblk, vmem_limit


# ---------------------------------------------------------------------------
# Wrapper
# ---------------------------------------------------------------------------
def consensus_forward(x, consensus_type="avg", dim=1, *, bblk=None, cblk=None,
                      min_kernel_bytes=256 * 1024):
    """Pallas implementation of Consensus.forward (TSN segmental consensus)."""
    if consensus_type == "identity":
        # Identity consensus is a no-op; do NOT launch a copy kernel.
        return x
    if consensus_type != "avg":
        raise ValueError(f"unknown consensus_type: {consensus_type}")

    isz = jnp.dtype(x.dtype).itemsize
    total_bytes = x.size * isz

    if dim != 1 or x.ndim < 2:
        # TODO(synk): general-dim Pallas kernel; the module default is dim=1.
        return jnp.mean(x.astype(jnp.float32), axis=dim, keepdims=True).astype(x.dtype)

    # Tiny problems: launch + per-step overhead dominates; fused XLA mean wins.
    if total_bytes < min_kernel_bytes and bblk is None and cblk is None:
        return jnp.mean(x.astype(jnp.float32), axis=1, keepdims=True).astype(x.dtype)

    B, T = x.shape[0], x.shape[1]
    trailing = x.shape[2:]
    C = int(math.prod(trailing)) if trailing else 1
    # Free, contiguous flatten of trailing feature dims -> lane-dense C.
    # TODO(synk): for pure (B, T, C<128) classification heads a T-into-lane
    # fold would further raise lane utilization; bounded win (HBM-read bound).
    x3 = x.reshape(B, T, C)

    plan_b, plan_c, vmem_limit = _plan_blocks(B, T, C, x.dtype)
    bblk = plan_b if bblk is None else min(int(bblk), B)
    cblk = plan_c if cblk is None else min(int(cblk), C)

    grid = (pl.cdiv(B, bblk), pl.cdiv(C, cblk))

    cp_kwargs = dict(dimension_semantics=("parallel", "parallel"))
    if vmem_limit is not None:
        cp_kwargs["vmem_limit_bytes"] = int(vmem_limit)

    out2d = pl.pallas_call(
        _consensus_avg_kernel,
        out_shape=jax.ShapeDtypeStruct((B, C), x.dtype),
        grid_spec=pltpu.PrefetchScalarGridSpec(
            num_scalar_prefetch=0,
            grid=grid,
            in_specs=[pl.BlockSpec((bblk, T, cblk), lambda b, c: (b, 0, c))],
            out_specs=pl.BlockSpec((bblk, cblk), lambda b, c: (b, c)),
        ),
        compiler_params=pltpu.CompilerParams(**cp_kwargs),
        cost_estimate=pl.CostEstimate(
            flops=B * T * C,
            transcendentals=0,
            bytes_accessed=B * T * C * isz + B * C * isz,
        ),
    )(x3)
    # Free XLA reshape back to the PyTorch keepdim=True shape.
    return out2d.reshape((B, 1) + trailing)


# ---------------------------------------------------------------------------
# Self-test
# ---------------------------------------------------------------------------
if __name__ == "__main__":
    key = jax.random.PRNGKey(0)

    # 1) 'avg' consensus on a small TSN-like shape, forcing the Pallas path.
    B, T, C = 2, 8, 32
    x = jax.random.normal(key, (B, T, C), dtype=jnp.float32)
    out_avg = jax.block_until_ready(
        consensus_forward(x, "avg", dim=1, min_kernel_bytes=0))
    ref_avg = jnp.mean(x, axis=1, keepdims=True)
    assert out_avg.shape == (B, 1, C)
    assert jnp.allclose(out_avg, ref_avg, atol=1e-5, rtol=1e-5)

    # 2) 'identity' consensus (wrapper no-op).
    out_id = jax.block_until_ready(consensus_forward(x, "identity", dim=1))
    assert out_id.shape == (B, T, C)
    assert jnp.allclose(out_id, x)

    # 3) Multi-block grid (bblk < B): sublane-aligned batch blocking.
    B2, T2, C2 = 16, 8, 128
    x2 = jax.random.normal(jax.random.PRNGKey(1), (B2, T2, C2), dtype=jnp.float32)
    out2 = jax.block_until_ready(consensus_forward(x2, "avg", dim=1, bblk=8))
    ref2 = jnp.mean(x2, axis=1, keepdims=True)
    assert out2.shape == (B2, 1, C2)
    assert jnp.allclose(out2, ref2, atol=1e-5, rtol=1e-5)

    # 4) bf16 input: fp32 per-slice accumulation path (no full-block upcast).
    x3 = jax.random.normal(jax.random.PRNGKey(2), (8, 8, 128), dtype=jnp.bfloat16)
    out3 = jax.block_until_ready(
        consensus_forward(x3, "avg", dim=1, min_kernel_bytes=0))
    ref3 = jnp.mean(x3.astype(jnp.float32), axis=1, keepdims=True).astype(jnp.bfloat16)
    assert out3.shape == (8, 1, 128)
    assert jnp.allclose(out3.astype(jnp.float32), ref3.astype(jnp.float32),
                        atol=2e-2, rtol=2e-2)

    # 5) Tiny-problem auto path (short-circuits to fused XLA mean).
    out4 = jax.block_until_ready(consensus_forward(x, "avg", dim=1))
    assert jnp.allclose(out4, ref_avg, atol=1e-5, rtol=1e-5)

    print("KERNEL_OK")
</pallas_src>

<mosaic_0001>
module attributes {stable_mosaic.version = 11 : i64} {
  func.func @_consensus_avg_kernel(%arg0: i32, %arg1: i32, %arg2: memref<2x8x32xf32, #tpu.memory_space<vmem>>, %arg3: memref<2x32xf32, #tpu.memory_space<vmem>>) attributes {dimension_semantics = [#tpu.dimension_semantics<parallel>, #tpu.dimension_semantics<parallel>], iteration_bounds = array<i64: 1, 1>, scalar_prefetch = 0 : i64, scratch_operands = 0 : i64, tpu.core_type = #tpu.core_type<tc>, window_params = [{transform_indices = @transform_0, window_bounds = array<i64: 2, 8, 32>}, {transform_indices = @transform_1, window_bounds = array<i64: 2, 32>}]} {
    %c0 = arith.constant 0 : index
    %c0_0 = arith.constant 0 : index
    %c0_1 = arith.constant 0 : index
    %0 = vector.load %arg2[%c0, %c0_0, %c0_1] : memref<2x8x32xf32, #tpu.memory_space<vmem>>, vector<2x8x32xf32>
    %cst = arith.constant dense<0.000000e+00> : vector<2x32xf32>
    %1 = vector.multi_reduction <add>, %0, %cst [1] : vector<2x8x32xf32> to vector<2x32xf32>
    %cst_2 = arith.constant 1.250000e-01 : f32
    %2 = vector.broadcast %cst_2 : f32 to vector<2x32xf32>
    %3 = arith.mulf %1, %2 : vector<2x32xf32>
    %c0_3 = arith.constant 0 : index
    %c0_4 = arith.constant 0 : index
    %4 = vector.load %arg3[%c0_3, %c0_4] : memref<2x32xf32, #tpu.memory_space<vmem>>, vector<2x32xf32>
    tpu.vector_store %arg3[%c0_3, %c0_4], %3 {strides = array<i32>} : memref<2x32xf32, #tpu.memory_space<vmem>>, vector<2x32xf32>,
    return
  }
  func.func @transform_0(%arg0: i32, %arg1: i32) -> (i32, i32, i32) {
    %c0_i32 = arith.constant 0 : i32
    %c0_i32_0 = arith.constant 0 : i32
    return %arg0, %c0_i32, %arg1 : i32, i32, i32
  }
  func.func @transform_1(%arg0: i32, %arg1: i32) -> (i32, i32) {
    %c0_i32 = arith.constant 0 : i32
    return %arg0, %arg1 : i32, i32
  }
}

</mosaic_0001>

<llo_original>
// kernel: tpu_custom_call.1
$region0: #{tpu_custom_call.1}
  #allocation0 [shape = 'u32[]', space=smem, size = 0x4, offset = 0x4, fixed_abs, tag = 'smem constant byte address 0x4 - core index']
  #allocation1 [shape = 'u32[72,128]{1,0:T(1,128)}', space=vmem, size = 0x9000, scoped, tag = 'internal scratch']
  %s0 = inlined_call_operand.hbm [shape: f32[2,8,32], index: 0, kind: input, shape index: {}]
  %s1 = inlined_call_operand.hbm [shape: f32[2,32], index: 1, kind: output, shape index: {}]
  %s2 = sld [smem:[#allocation0]]
  $region18: #{tpu_custom_call.1} parent=0
    _
  %s4 = ssub.s32 1, %s2
  %s5 = scalar_select 0, %s4, %s2
  $region1: #{tpu_custom_call.1} parent=0
    #allocation2 [shape = 'u8[8192]{0}', space=vmem, size = 0x2000, scoped, tag = 'input window, operand 0, single buffered']
    #allocation3 [shape = 's32[1]{0}', space=sflag, size = 0x4, scoped, tag = 'scoped memory for tpu_custom_call.1']
    #allocation4 [shape = 's32[1]{0}', space=sflag, size = 0x4, scoped, tag = 'scoped memory for tpu_custom_call.1']
    #allocation5 [shape = 'u8[1024]{0}', space=vmem, size = 0x400, scoped, tag = 'output window, operand 0, single buffered']
    %6 = vsyncpa [#allocation3], 0
    %7 = vsyncpa [#allocation4], 0
    // Predicated region
    $region2: #{tpu_custom_call.1} parent=1 // pred_check
      _
    $region3: #{tpu_custom_call.1} parent=1 // pred_check_branch
      %9 = sbr.rel (0) target = $region5
    $region4: #{tpu_custom_call.1} parent=1 // pred_region
      %11 = vsyncadd [#allocation3], 0
      %s12 = sshll.u32 %s0, 4
      %s13 = int_to_ptr.hbm [resolvable:$true] %s12
      %s14 = sshll.u32 [#allocation2], 4
      %s15 = int_to_ptr.vmem [resolvable:$true] %s14
      %20 = dma.hbm_to_vmem [thread:$0]  %s13, 256, %s15, [#allocation3], 128, 128, 8
    $region5: #{tpu_custom_call.1} parent=1 // pred_fallthru
      _
    // Predicated region
    $region6: #{tpu_custom_call.1} parent=1 // pred_check
      _
    $region7: #{tpu_custom_call.1} parent=1 // pred_check_branch
      %22 = sbr.rel (0) target = $region9
    $region8: #{tpu_custom_call.1} parent=1 // pred_region
      %24 = dma.done [#allocation3], 256
    $region9: #{tpu_custom_call.1} parent=1 // pred_fallthru
      _
    %v25 = vld [vmem:[#allocation2] sm:$0xff]
    %v26 = vld [vmem:[#allocation2 + $0x8] sm:$0xff]
    %vm27 = vcmask 261120
    %v28 = vsel %vm27, %v25, 0.0
    %v29 = vrot.slane %v28, 4
    %v30 = vadd.f32 %v28, %v29
    %v31 = vrot.slane %v30, 2
    %v32 = vadd.f32 %v30, %v31
    %v33 = vrot.slane %v32, 1
    %v34 = vadd.f32 %v32, %v33
    %v35 = vsel %vm27, %v26, 0.0
    %v36 = vrot.slane %v35, 4
    %v37 = vadd.f32 %v35, %v36
    %v38 = vrot.slane %v37, 2
    %v39 = vadd.f32 %v37, %v38
    %v40 = vrot.slane %v39, 1
    %v41 = vadd.f32 %v39, %v40
    %v42 = vmul.f32 %v34, 0.125
    %v43 = vmul.f32 %v41, 0.125
    %vm46 = vcmask 1041409
    %v47 = vsel %vm46, %v43, %v42
    %vm49 = vcmask 254976
    %50 = vst.msk [vmem:[#allocation5] sm:$0x3] %vm49, %v47
    // Predicated region
    $region10: #{tpu_custom_call.1} parent=1 // pred_check
      _
    $region11: #{tpu_custom_call.1} parent=1 // pred_check_branch
      %52 = sbr.rel (0) target = $region13
    $region12: #{tpu_custom_call.1} parent=1 // pred_region
      %54 = vsyncadd [#allocation4], 0
      %s56 = sshll.u32 [#allocation5], 4
      %s57 = int_to_ptr.vmem [resolvable:$true] %s56
      %s58 = sshll.u32 %s1, 4
      %s59 = int_to_ptr.hbm [resolvable:$true] %s58
      %61 = dma.vmem_to_hbm [thread:$0]  %s57, 32, %s59, [#allocation4]
    $region13: #{tpu_custom_call.1} parent=1 // pred_fallthru
      _
    // Predicated region
    $region14: #{tpu_custom_call.1} parent=1 // pred_check
      _
    $region15: #{tpu_custom_call.1} parent=1 // pred_check_branch
      %63 = sbr.rel (0) target = $region17
    $region16: #{tpu_custom_call.1} parent=1 // pred_region
      %65 = dma.done [#allocation4], 32
    $region17: #{tpu_custom_call.1} parent=1 // pred_fallthru
      _
    %66 = vsyncpa [#allocation3], 1
    %67 = vsyncpa [#allocation4], 1

</llo_original>
